<compile_context>
chip_gen: v7x
topology: tpu7x:2x2x1
jax: 0.10.0
libtpu: 0.0.40
codegen_flags: <defaults>
</compile_context>

<pallas_src>
import functools

import jax
import jax.numpy as jnp
from jax.experimental import pallas as pl
from jax.experimental.pallas import tpu as pltpu

RELU = 0.2
BN_EPS = 1e-5
_MAX_BATCH_TILE = 32          # bounds in-kernel unrolling of the assembly copies


def _vmem_limit_bytes():
    """Generation-aware VMEM budget: ~3/4 of physical (≈48 MiB v7x, ≈96 MiB v5e/v6e)."""
    try:
        phys = int(pltpu.get_tpu_info().vmem_capacity_bytes)
    except Exception:
        phys = 64 * 1024 * 1024            # conservative (v7x-sized) fallback
    return min(phys * 3 // 4, 100 * 1024 * 1024)


def _assemble_conv_rhs(xe_ref, xo_ref, rhs_ref, *, tn, k_taps, c_in, l_out):
    """Pack the stride-2 conv receptive fields of a whole batch tile into one
    (K*C_in, TN*L_out) bf16 VMEM operand using only static contiguous slices.

    Even taps k read the even phase at offset k//2, odd taps the odd phase."""
    for n in range(tn):
        col = n * l_out
        for k in range(k_taps):
            src = xe_ref if (k % 2 == 0) else xo_ref
            s = k // 2
            rhs_ref[k * c_in:(k + 1) * c_in, col:col + l_out] = src[n, :, s:s + l_out]


def _stats_kernel(xe_ref, xo_ref, w_ref, psum_ref, psq_ref, rhs_ref,
                  *, tn, k_taps, c_in, l_out):
    """Pass 1: one big MXU dot for the whole tile -> per-tile BN partial stats."""
    _assemble_conv_rhs(xe_ref, xo_ref, rhs_ref, tn=tn, k_taps=k_taps, c_in=c_in, l_out=l_out)
    y = jnp.dot(w_ref[...], rhs_ref[...], preferred_element_type=jnp.float32)
    psum_ref[...] = jnp.sum(y, axis=1, keepdims=True)[None]
    psq_ref[...] = jnp.sum(y * y, axis=1, keepdims=True)[None]


def _conv_bn_lrelu_kernel(xe_ref, xo_ref, w_ref, ss_ref, o_ref, rhs_ref,
                          *, tn, k_taps, c_in, l_out):
    """Pass 2: recompute conv (single dot), apply folded BN scale/shift + LeakyReLU."""
    _assemble_conv_rhs(xe_ref, xo_ref, rhs_ref, tn=tn, k_taps=k_taps, c_in=c_in, l_out=l_out)
    y = jnp.dot(w_ref[...], rhs_ref[...], preferred_element_type=jnp.float32)
    z = y * ss_ref[:, 0:1] + ss_ref[:, 1:2]          # (C_out, TN*L_out) f32
    z = jnp.where(z >= 0, z, RELU * z)
    for n in range(tn):
        o_ref[n] = z[:, n * l_out:(n + 1) * l_out].astype(o_ref.dtype)


def downsampling_d_forward(x, conv_w, conv_b, bn_gamma, bn_beta, *, size, stride=2):
    """x: (N, C_in, L) f32.  Returns (N, C_out, L_out) f32 in NCL layout."""
    assert stride == 2, "Downsampling_D always uses stride=2"
    N, C_in, L = x.shape
    C_out = conv_w.shape[0]
    K = size
    pad = (K - 1) // 2
    L_pad = L + 2 * pad
    L_out = (L_pad - K) // stride + 1
    Le = (L_pad + 1) // 2                 # even-phase length
    Lo = L_pad // 2                       # odd-phase length

    vmem_limit = _vmem_limit_bytes()

    # Pass-2 per-sample VMEM footprint (the heavier pass): double-buffered bf16
    # inputs, the bf16 RHS assembly scratch, the double-buffered f32 output and
    # headroom for the live f32 activation values.
    per_sample = (
        2 * C_in * (Le + Lo) * 2
        + K * C_in * L_out * 2
        + 2 * C_out * L_out * 4
        + 2 * C_out * L_out * 4
    )
    fixed = 2 * C_out * K * C_in * 2 + 2 * C_out * 2 * 4 + (1 << 20)
    budget = max(int(vmem_limit * 0.85) - fixed, per_sample)

    tile_cap = max(1, min(_MAX_BATCH_TILE, 256 // max(K, 1)))   # bound kernel unrolling
    TN = max(1, min(N, tile_cap, budget // max(per_sample, 1)))
    if N >= 2:
        TN = min(TN, -(-N // 2))          # keep >= 2 grid steps so both v7x TCs get work
    n_tiles = -(-N // TN)
    N_pad = n_tiles * TN                  # zero samples contribute 0 to bias-free stats

    # ---- cheap XLA prep: bf16 cast FIRST, then zero-pad (batch + length) and
    # even/odd phase split (strided slices; no gather, no K-fold duplication).
    xb = x.astype(jnp.bfloat16)
    xb = jnp.pad(xb, ((0, N_pad - N), (0, 0), (pad, pad)))
    x_even = xb[:, :, 0::2]               # taps k = 0, 2, ...
    x_odd = xb[:, :, 1::2]                # taps k = 1, 3, ...

    # (C_out, C_in, K) -> (C_out, K*C_in); column order k*C_in + ci matches the RHS rows.
    w2d = jnp.transpose(conv_w, (0, 2, 1)).reshape(C_out, K * C_in).astype(jnp.bfloat16)

    cparams = pltpu.CompilerParams(
        dimension_semantics=("parallel",),
        vmem_limit_bytes=vmem_limit,
    )
    rhs_scratch = pltpu.VMEM((K * C_in, TN * L_out), jnp.bfloat16)

    # ---- pass 1: per-tile BN partial statistics (no conv writeback) --------
    stats_kernel = functools.partial(_stats_kernel, tn=TN, k_taps=K, c_in=C_in, l_out=L_out)
    psum, psq = pl.pallas_call(
        stats_kernel,
        grid=(n_tiles,),
        in_specs=[
            pl.BlockSpec((TN, C_in, Le), lambda i: (i, 0, 0)),
            pl.BlockSpec((TN, C_in, Lo), lambda i: (i, 0, 0)),
            pl.BlockSpec((C_out, K * C_in), lambda i: (0, 0)),
        ],
        out_specs=(
            pl.BlockSpec((1, C_out, 1), lambda i: (i, 0, 0)),
            pl.BlockSpec((1, C_out, 1), lambda i: (i, 0, 0)),
        ),
        out_shape=(
            jax.ShapeDtypeStruct((n_tiles, C_out, 1), jnp.float32),
            jax.ShapeDtypeStruct((n_tiles, C_out, 1), jnp.float32),
        ),
        scratch_shapes=[rhs_scratch],
        compiler_params=cparams,
    )(x_even, x_odd, w2d)

    # ---- tiny JAX glue: combine stats, fold bias + BN into one scale/shift --
    cnt = jnp.float32(N * L_out)
    mean0 = jnp.sum(psum, axis=0) / cnt                 # (C_out, 1) mean of bias-free conv
    ex2 = jnp.sum(psq, axis=0) / cnt
    var = jnp.maximum(ex2 - mean0 * mean0, 0.0)         # biased variance (training mode)
    g = bn_gamma.reshape(C_out, 1).astype(jnp.float32)
    be = bn_beta.reshape(C_out, 1).astype(jnp.float32)
    scale = g * jax.lax.rsqrt(var + BN_EPS)
    # conv bias cancels exactly under training-mode BN: shift = beta - mean0*scale.
    shift = be - mean0 * scale
    ss = jnp.concatenate([scale, shift], axis=1)        # (C_out, 2), lane-packed

    # ---- pass 2: recompute conv + fused scale/shift + LeakyReLU ------------
    fused_kernel = functools.partial(_conv_bn_lrelu_kernel, tn=TN, k_taps=K, c_in=C_in, l_out=L_out)
    out = pl.pallas_call(
        fused_kernel,
        grid=(n_tiles,),
        in_specs=[
            pl.BlockSpec((TN, C_in, Le), lambda i: (i, 0, 0)),
            pl.BlockSpec((TN, C_in, Lo), lambda i: (i, 0, 0)),
            pl.BlockSpec((C_out, K * C_in), lambda i: (0, 0)),
            pl.BlockSpec((C_out, 2), lambda i: (0, 0)),
        ],
        out_specs=pl.BlockSpec((TN, C_out, L_out), lambda i: (i, 0, 0)),
        out_shape=jax.ShapeDtypeStruct((N_pad, C_out, L_out), jnp.float32),
        scratch_shapes=[rhs_scratch],
        compiler_params=cparams,
    )(x_even, x_odd, w2d, ss)

    if N_pad != N:
        out = out[:N]
    # TODO(synk): BatchNorm1d running_mean/running_var (training-mode side-effect
    # buffers) are not updated; the forward output is unaffected.
    return out


if __name__ == "__main__":
    # Small shapes consistent with the module: x is (N, C_in, L) for Conv1d.
    N, C_in, C_out, L, K = 2, 4, 8, 16, 3

    key = jax.random.PRNGKey(0)
    k_x, k_w, k_b = jax.random.split(key, 3)

    x = jax.random.normal(k_x, (N, C_in, L), dtype=jnp.float32)

    # Deterministic PyTorch-like init (uniform fan-in bound for conv,
    # BN gamma=1 / beta=0 as in nn.BatchNorm1d defaults).
    fan_in = C_in * K
    bound = 1.0 / (fan_in ** 0.5)
    conv_w = jax.random.uniform(k_w, (C_out, C_in, K), jnp.float32, -bound, bound)
    conv_b = jax.random.uniform(k_b, (C_out,), jnp.float32, -bound, bound)
    bn_gamma = jnp.ones((C_out,), jnp.float32)
    bn_beta = jnp.zeros((C_out,), jnp.float32)

    fwd = jax.jit(downsampling_d_forward, static_argnames=("size", "stride"))
    y = fwd(x, conv_w, conv_b, bn_gamma, bn_beta, size=K)
    y = jax.block_until_ready(y)

    pad = (K - 1) // 2
    L_out = (L + 2 * pad - K) // 2 + 1
    assert y.shape == (N, C_out, L_out), y.shape

    # Pure-JAX f32 reference (PyTorch semantics: training-mode BN, biased var).
    conv_ref = jax.lax.conv_general_dilated(
        x, conv_w, window_strides=(2,), padding=[(pad, pad)],
        dimension_numbers=("NCH", "OIH", "NCH")) + conv_b[None, :, None]
    mu = jnp.mean(conv_ref, axis=(0, 2), keepdims=True)
    var = jnp.var(conv_ref, axis=(0, 2), keepdims=True)
    bn = (conv_ref - mu) * jax.lax.rsqrt(var + BN_EPS) * bn_gamma[None, :, None] \
        + bn_beta[None, :, None]
    ref = jnp.where(bn >= 0, bn, RELU * bn)

    err = float(jnp.max(jnp.abs(y - ref)))
    assert err < 0.08, f"max abs err vs f32 reference: {err}"  # bf16 MXU operands
    assert bool(jnp.all(jnp.isfinite(y)))
    print("KERNEL_OK")
</pallas_src>

<mosaic_0001>
module attributes {stable_mosaic.version = 11 : i64} {
  func.func @_stats_kernel(%arg0: i32, %arg1: memref<1x4x9xbf16, #tpu.memory_space<vmem>>, %arg2: memref<1x4x9xbf16, #tpu.memory_space<vmem>>, %arg3: memref<8x12xbf16, #tpu.memory_space<vmem>>, %arg4: memref<1x8x1xf32, #tpu.memory_space<vmem>>, %arg5: memref<1x8x1xf32, #tpu.memory_space<vmem>>, %arg6: memref<12x8xbf16, #tpu.memory_space<vmem>>) attributes {dimension_semantics = [#tpu.dimension_semantics<parallel>], iteration_bounds = array<i64: 2>, scalar_prefetch = 0 : i64, scratch_operands = 1 : i64, tpu.core_type = #tpu.core_type<tc>, window_params = [{transform_indices = @transform_0, window_bounds = array<i64: 1, 4, 9>}, {transform_indices = @transform_1, window_bounds = array<i64: 1, 4, 9>}, {pipeline_mode = #tpu.pipeline_mode<synchronous>, transform_indices = @transform_2, window_bounds = array<i64: 8, 12>}, {transform_indices = @transform_3, window_bounds = array<i64: 1, 8, 1>}, {transform_indices = @transform_4, window_bounds = array<i64: 1, 8, 1>}]} {
    %c0 = arith.constant 0 : index
    %c0_0 = arith.constant 0 : index
    %c0_1 = arith.constant 0 : index
    %0 = vector.load %arg1[%c0, %c0_0, %c0_1] : memref<1x4x9xbf16, #tpu.memory_space<vmem>>, vector<1x4x8xbf16>
    %1 = vector.shape_cast %0 : vector<1x4x8xbf16> to vector<4x8xbf16>
    %c0_2 = arith.constant 0 : index
    %c0_3 = arith.constant 0 : index
    %2 = vector.load %arg6[%c0_2, %c0_3] : memref<12x8xbf16, #tpu.memory_space<vmem>>, vector<4x8xbf16>
    tpu.vector_store %arg6[%c0_2, %c0_3], %1 {strides = array<i32>} : memref<12x8xbf16, #tpu.memory_space<vmem>>, vector<4x8xbf16>,
    %c0_4 = arith.constant 0 : index
    %c0_5 = arith.constant 0 : index
    %c0_6 = arith.constant 0 : index
    %3 = vector.load %arg2[%c0_4, %c0_5, %c0_6] : memref<1x4x9xbf16, #tpu.memory_space<vmem>>, vector<1x4x8xbf16>
    %4 = vector.shape_cast %3 : vector<1x4x8xbf16> to vector<4x8xbf16>
    %c4 = arith.constant 4 : index
    %c0_7 = arith.constant 0 : index
    %5 = vector.load %arg6[%c4, %c0_7] : memref<12x8xbf16, #tpu.memory_space<vmem>>, vector<4x8xbf16>
    tpu.vector_store %arg6[%c4, %c0_7], %4 {strides = array<i32>} : memref<12x8xbf16, #tpu.memory_space<vmem>>, vector<4x8xbf16>,
    %c0_8 = arith.constant 0 : index
    %c0_9 = arith.constant 0 : index
    %c1 = arith.constant 1 : index
    %6 = vector.load %arg1[%c0_8, %c0_9, %c1] : memref<1x4x9xbf16, #tpu.memory_space<vmem>>, vector<1x4x8xbf16>
    %7 = vector.shape_cast %6 : vector<1x4x8xbf16> to vector<4x8xbf16>
    %c8 = arith.constant 8 : index
    %c0_10 = arith.constant 0 : index
    %8 = vector.load %arg6[%c8, %c0_10] : memref<12x8xbf16, #tpu.memory_space<vmem>>, vector<4x8xbf16>
    tpu.vector_store %arg6[%c8, %c0_10], %7 {strides = array<i32>} : memref<12x8xbf16, #tpu.memory_space<vmem>>, vector<4x8xbf16>,
    %c0_11 = arith.constant 0 : index
    %c0_12 = arith.constant 0 : index
    %9 = vector.load %arg3[%c0_11, %c0_12] : memref<8x12xbf16, #tpu.memory_space<vmem>>, vector<8x12xbf16>
    %c0_13 = arith.constant 0 : index
    %c0_14 = arith.constant 0 : index
    %10 = vector.load %arg6[%c0_13, %c0_14] : memref<12x8xbf16, #tpu.memory_space<vmem>>, vector<12x8xbf16>
    %cst = arith.constant dense<0.000000e+00> : vector<8x8xf32>
    %11 = tpu.matmul %9, %10, %cst {dimension_numbers = #tpu.dot_dimension_numbers<[1], [0], [0], [1], [0, 0, 1, 1], [], []>} : vector<8x12xbf16>, vector<12x8xbf16>, vector<8x8xf32> -> vector<8x8xf32>
    %cst_15 = arith.constant dense<0.000000e+00> : vector<8xf32>
    %12 = vector.multi_reduction <add>, %11, %cst_15 [1] : vector<8x8xf32> to vector<8xf32>
    %13 = vector.shape_cast %12 : vector<8xf32> to vector<8x1xf32>
    %14 = vector.shape_cast %13 : vector<8x1xf32> to vector<1x8x1xf32>
    %c0_16 = arith.constant 0 : index
    %c0_17 = arith.constant 0 : index
    %c0_18 = arith.constant 0 : index
    %15 = vector.load %arg4[%c0_16, %c0_17, %c0_18] : memref<1x8x1xf32, #tpu.memory_space<vmem>>, vector<1x8x1xf32>
    tpu.vector_store %arg4[%c0_16, %c0_17, %c0_18], %14 {strides = array<i32>} : memref<1x8x1xf32, #tpu.memory_space<vmem>>, vector<1x8x1xf32>,
    %16 = arith.mulf %11, %11 : vector<8x8xf32>
    %cst_19 = arith.constant dense<0.000000e+00> : vector<8xf32>
    %17 = vector.multi_reduction <add>, %16, %cst_19 [1] : vector<8x8xf32> to vector<8xf32>
    %18 = vector.shape_cast %17 : vector<8xf32> to vector<8x1xf32>
    %19 = vector.shape_cast %18 : vector<8x1xf32> to vector<1x8x1xf32>
    %c0_20 = arith.constant 0 : index
    %c0_21 = arith.constant 0 : index
    %c0_22 = arith.constant 0 : index
    %20 = vector.load %arg5[%c0_20, %c0_21, %c0_22] : memref<1x8x1xf32, #tpu.memory_space<vmem>>, vector<1x8x1xf32>
    tpu.vector_store %arg5[%c0_20, %c0_21, %c0_22], %19 {strides = array<i32>} : memref<1x8x1xf32, #tpu.memory_space<vmem>>, vector<1x8x1xf32>,
    return
  }
  func.func @transform_0(%arg0: i32) -> (i32, i32, i32) {
    %c0_i32 = arith.constant 0 : i32
    %c0_i32_0 = arith.constant 0 : i32
    %c0_i32_1 = arith.constant 0 : i32
    return %arg0, %c0_i32, %c0_i32_0 : i32, i32, i32
  }
  func.func @transform_1(%arg0: i32) -> (i32, i32, i32) {
    %c0_i32 = arith.constant 0 : i32
    %c0_i32_0 = arith.constant 0 : i32
    %c0_i32_1 = arith.constant 0 : i32
    return %arg0, %c0_i32, %c0_i32_0 : i32, i32, i32
  }
  func.func @transform_2(%arg0: i32) -> (i32, i32) {
    %c0_i32 = arith.constant 0 : i32
    %c0_i32_0 = arith.constant 0 : i32
    %c0_i32_1 = arith.constant 0 : i32
    return %c0_i32, %c0_i32_0 : i32, i32
  }
  func.func @transform_3(%arg0: i32) -> (i32, i32, i32) {
    %c0_i32 = arith.constant 0 : i32
    %c0_i32_0 = arith.constant 0 : i32
    %c0_i32_1 = arith.constant 0 : i32
    return %arg0, %c0_i32, %c0_i32_0 : i32, i32, i32
  }
  func.func @transform_4(%arg0: i32) -> (i32, i32, i32) {
    %c0_i32 = arith.constant 0 : i32
    %c0_i32_0 = arith.constant 0 : i32
    %c0_i32_1 = arith.constant 0 : i32
    return %arg0, %c0_i32, %c0_i32_0 : i32, i32, i32
  }
}

module attributes {stable_mosaic.version = 11 : i64} {
  func.func @_conv_bn_lrelu_kernel(%arg0: i32, %arg1: memref<1x4x9xbf16, #tpu.memory_space<vmem>>, %arg2: memref<1x4x9xbf16, #tpu.memory_space<vmem>>, %arg3: memref<8x12xbf16, #tpu.memory_space<vmem>>, %arg4: memref<8x2xf32, #tpu.memory_space<vmem>>, %arg5: memref<1x8x8xf32, #tpu.memory_space<vmem>>, %arg6: memref<12x8xbf16, #tpu.memory_space<vmem>>) attributes {dimension_semantics = [#tpu.dimension_semantics<parallel>], iteration_bounds = array<i64: 2>, scalar_prefetch = 0 : i64, scratch_operands = 1 : i64, tpu.core_type = #tpu.core_type<tc>, window_params = [{transform_indices = @transform_0, window_bounds = array<i64: 1, 4, 9>}, {transform_indices = @transform_1, window_bounds = array<i64: 1, 4, 9>}, {pipeline_mode = #tpu.pipeline_mode<synchronous>, transform_indices = @transform_2, window_bounds = array<i64: 8, 12>}, {pipeline_mode = #tpu.pipeline_mode<synchronous>, transform_indices = @transform_3, window_bounds = array<i64: 8, 2>}, {transform_indices = @transform_4, window_bounds = array<i64: 1, 8, 8>}]} {
    %c0 = arith.constant 0 : index
    %c0_0 = arith.constant 0 : index
    %c0_1 = arith.constant 0 : index
    %0 = vector.load %arg1[%c0, %c0_0, %c0_1] : memref<1x4x9xbf16, #tpu.memory_space<vmem>>, vector<1x4x8xbf16>
    %1 = vector.shape_cast %0 : vector<1x4x8xbf16> to vector<4x8xbf16>
    %c0_2 = arith.constant 0 : index
    %c0_3 = arith.constant 0 : index
    %2 = vector.load %arg6[%c0_2, %c0_3] : memref<12x8xbf16, #tpu.memory_space<vmem>>, vector<4x8xbf16>
    tpu.vector_store %arg6[%c0_2, %c0_3], %1 {strides = array<i32>} : memref<12x8xbf16, #tpu.memory_space<vmem>>, vector<4x8xbf16>,
    %c0_4 = arith.constant 0 : index
    %c0_5 = arith.constant 0 : index
    %c0_6 = arith.constant 0 : index
    %3 = vector.load %arg2[%c0_4, %c0_5, %c0_6] : memref<1x4x9xbf16, #tpu.memory_space<vmem>>, vector<1x4x8xbf16>
    %4 = vector.shape_cast %3 : vector<1x4x8xbf16> to vector<4x8xbf16>
    %c4 = arith.constant 4 : index
    %c0_7 = arith.constant 0 : index
    %5 = vector.load %arg6[%c4, %c0_7] : memref<12x8xbf16, #tpu.memory_space<vmem>>, vector<4x8xbf16>
    tpu.vector_store %arg6[%c4, %c0_7], %4 {strides = array<i32>} : memref<12x8xbf16, #tpu.memory_space<vmem>>, vector<4x8xbf16>,
    %c0_8 = arith.constant 0 : index
    %c0_9 = arith.constant 0 : index
    %c1 = arith.constant 1 : index
    %6 = vector.load %arg1[%c0_8, %c0_9, %c1] : memref<1x4x9xbf16, #tpu.memory_space<vmem>>, vector<1x4x8xbf16>
    %7 = vector.shape_cast %6 : vector<1x4x8xbf16> to vector<4x8xbf16>
    %c8 = arith.constant 8 : index
    %c0_10 = arith.constant 0 : index
    %8 = vector.load %arg6[%c8, %c0_10] : memref<12x8xbf16, #tpu.memory_space<vmem>>, vector<4x8xbf16>
    tpu.vector_store %arg6[%c8, %c0_10], %7 {strides = array<i32>} : memref<12x8xbf16, #tpu.memory_space<vmem>>, vector<4x8xbf16>,
    %c0_11 = arith.constant 0 : index
    %c0_12 = arith.constant 0 : index
    %9 = vector.load %arg3[%c0_11, %c0_12] : memref<8x12xbf16, #tpu.memory_space<vmem>>, vector<8x12xbf16>
    %c0_13 = arith.constant 0 : index
    %c0_14 = arith.constant 0 : index
    %10 = vector.load %arg6[%c0_13, %c0_14] : memref<12x8xbf16, #tpu.memory_space<vmem>>, vector<12x8xbf16>
    %cst = arith.constant dense<0.000000e+00> : vector<8x8xf32>
    %11 = tpu.matmul %9, %10, %cst {dimension_numbers = #tpu.dot_dimension_numbers<[1], [0], [0], [1], [0, 0, 1, 1], [], []>} : vector<8x12xbf16>, vector<12x8xbf16>, vector<8x8xf32> -> vector<8x8xf32>
    %c0_15 = arith.constant 0 : index
    %c0_16 = arith.constant 0 : index
    %12 = vector.load %arg4[%c0_15, %c0_16] : memref<8x2xf32, #tpu.memory_space<vmem>>, vector<8x1xf32>
    %13 = vector.broadcast %12 : vector<8x1xf32> to vector<8x8xf32>
    %14 = arith.mulf %11, %13 : vector<8x8xf32>
    %c0_17 = arith.constant 0 : index
    %c1_18 = arith.constant 1 : index
    %15 = vector.load %arg4[%c0_17, %c1_18] : memref<8x2xf32, #tpu.memory_space<vmem>>, vector<8x1xf32>
    %16 = vector.broadcast %15 : vector<8x1xf32> to vector<8x8xf32>
    %17 = arith.addf %14, %16 : vector<8x8xf32>
    %cst_19 = arith.constant 0.000000e+00 : f32
    %18 = vector.broadcast %cst_19 : f32 to vector<8x8xf32>
    %19 = arith.cmpf oge, %17, %18 : vector<8x8xf32>
    %cst_20 = arith.constant 2.000000e-01 : f32
    %20 = vector.broadcast %cst_20 : f32 to vector<8x8xf32>
    %21 = arith.mulf %20, %17 : vector<8x8xf32>
    %22 = arith.select %19, %17, %21 : vector<8x8xi1>, vector<8x8xf32>
    %c0_21 = arith.constant 0 : index
    %c0_22 = arith.constant 0 : index
    %c0_23 = arith.constant 0 : index
    %23 = vector.load %arg5[%c0_21, %c0_22, %c0_23] : memref<1x8x8xf32, #tpu.memory_space<vmem>>, vector<1x8x8xf32>
    %24 = vector.shape_cast %23 : vector<1x8x8xf32> to vector<8x8xf32>
    %25 = vector.shape_cast %22 : vector<8x8xf32> to vector<1x8x8xf32>
    tpu.vector_store %arg5[%c0_21, %c0_22, %c0_23], %25 {strides = array<i32>} : memref<1x8x8xf32, #tpu.memory_space<vmem>>, vector<1x8x8xf32>,
    return
  }
  func.func @transform_0(%arg0: i32) -> (i32, i32, i32) {
    %c0_i32 = arith.constant 0 : i32
    %c0_i32_0 = arith.constant 0 : i32
    %c0_i32_1 = arith.constant 0 : i32
    return %arg0, %c0_i32, %c0_i32_0 : i32, i32, i32
  }
  func.func @transform_1(%arg0: i32) -> (i32, i32, i32) {
    %c0_i32 = arith.constant 0 : i32
    %c0_i32_0 = arith.constant 0 : i32
    %c0_i32_1 = arith.constant 0 : i32
    return %arg0, %c0_i32, %c0_i32_0 : i32, i32, i32
  }
  func.func @transform_2(%arg0: i32) -> (i32, i32) {
    %c0_i32 = arith.constant 0 : i32
    %c0_i32_0 = arith.constant 0 : i32
    %c0_i32_1 = arith.constant 0 : i32
    return %c0_i32, %c0_i32_0 : i32, i32
  }
  func.func @transform_3(%arg0: i32) -> (i32, i32) {
    %c0_i32 = arith.constant 0 : i32
    %c0_i32_0 = arith.constant 0 : i32
    %c0_i32_1 = arith.constant 0 : i32
    return %c0_i32, %c0_i32_0 : i32, i32
  }
  func.func @transform_4(%arg0: i32) -> (i32, i32, i32) {
    %c0_i32 = arith.constant 0 : i32
    %c0_i32_0 = arith.constant 0 : i32
    %c0_i32_1 = arith.constant 0 : i32
    return %arg0, %c0_i32, %c0_i32_0 : i32, i32, i32
  }
}

</mosaic_0001>

<llo_original>
// kernel: downsampling_d_forward.2
$region0: #{downsampling_d_forward.2}
  #allocation0 [shape = 'u32[]', space=smem, size = 0x4, offset = 0x4, fixed_abs, tag = 'smem constant byte address 0x4 - core index']
  #allocation1 [shape = 'u32[144,128]{1,0:T(1,128)}', space=vmem, size = 0x12000, scoped, tag = 'internal scratch']
  #allocation2 [shape = 'bf16[12,8]{1,0:T(8,128)(2,1)}', space=vmem, size = 0x1000, scoped, tag = 'scratch operand']
  %s0 = inlined_call_operand.vmem [shape: bf16[2,4,9], index: 0, kind: input, shape index: {}]
  %s1 = inlined_call_operand.vmem [shape: bf16[2,4,9], index: 1, kind: input, shape index: {}]
  %s2 = inlined_call_operand.vmem [shape: bf16[8,12], index: 2, kind: input, shape index: {}]
  %s3 = inlined_call_operand.vmem [shape: f32[2,8,1], index: 3, kind: output, shape index: {0}]
  %s4 = inlined_call_operand.vmem [shape: f32[2,8,1], index: 4, kind: output, shape index: {1}]
  %5 = xla_tuple %s3, %s4
  %s6 = sld [smem:[#allocation0]]
  $region53: #{downsampling_d_forward.2} parent=0
    _
  %s8 = ssub.s32 1, %s6
  %s9 = scalar_select 0, %s8, %s6
  loop: start=0, step=1, limit=4
  $region2: #{downsampling_d_forward.2} parent=0 // loop_pre_header
    _
  $region3: #{downsampling_d_forward.2} parent=0 // loop_header
    %s11 = sphi 0, %s15
    %p12 = scmp.ge.s32.totalorder %s11, 4
    %s21 = sphi 0, %s23
    %s24 = sphi 0, %s21
    %s25 = sphi 0, %s24
    %s41 = sphi 0, %s25
    %s47 = sphi 0, %s49
    %s50 = sphi 0, %s47
    %s51 = sphi 0, %s50
    %s67 = sphi 0, %s51
    %s71 = sphi 0, %s71
    %s73 = sphi 0, %s71
    %s74 = sphi 0, %s73
    %s88 = sphi 0, %s74
    %s94 = sphi 0, %s96
    %s97 = sphi 0, %s94
    %s98 = sphi 0, %s97
    %s114 = sphi 0, %s98
    %s120 = sphi 0, %s122
    %s123 = sphi 0, %s120
    %s124 = sphi 0, %s123
    %s140 = sphi 0, %s124
  $region4: #{downsampling_d_forward.2} parent=0 // loop_header_branch
    %14 = sbr.rel (%p12) target = $region8
  $region5: #{downsampling_d_forward.2} parent=0 // loop_body
    %s16 = ssub.s32 %s11, 1
    %s17 = ssub.s32 %s11, 2
    %s18 = sadd.s32 %s11, 1
    %s19 = ssub.s32 %s11, %s18
    %p20 = scmp.eq.s32.totalorder %s19, 0
    %s22 = sadd.s32 %s21, 1
    %s23 = scalar_select %p20, %s21, %s22
    %p26 = pneg %p20
    %p27 = scmp.eq.s32.totalorder %s11, 1
    %p28 = por %p26, %p27
    %p29 = scmp.ne.s32.totalorder %s21, %s24
    %p30 = scmp.eq.s32.totalorder %s11, 0
    %p31 = por %p29, %p30
    %p32 = scmp.ne.s32.totalorder %s21, %s24
    %p33 = scmp.eq.s32.totalorder %s16, 1
    %p34 = por %p32, %p33
    %p35 = scmp.ne.s32.totalorder %s24, %s25
    %p36 = scmp.eq.s32.totalorder %s16, 0
    %p37 = por %p35, %p36
    %p38 = scmp.ne.s32.totalorder %s24, %s25
    %p39 = scmp.eq.s32.totalorder %s17, 1
    %p40 = por %p38, %p39
    %p42 = scmp.ne.s32.totalorder %s25, %s41
    %p43 = scmp.eq.s32.totalorder %s17, 0
    %p44 = por %p42, %p43
    %s45 = ssub.s32 %s11, %s18
    %p46 = scmp.eq.s32.totalorder %s45, 0
    %s48 = sadd.s32 %s47, 1
    %s49 = scalar_select %p46, %s47, %s48
    %p52 = pneg %p46
    %p53 = scmp.eq.s32.totalorder %s11, 1
    %p54 = por %p52, %p53
    %p55 = scmp.ne.s32.totalorder %s47, %s50
    %p56 = scmp.eq.s32.totalorder %s11, 0
    %p57 = por %p55, %p56
    %p58 = scmp.ne.s32.totalorder %s47, %s50
    %p59 = scmp.eq.s32.totalorder %s16, 1
    %p60 = por %p58, %p59
    %p61 = scmp.ne.s32.totalorder %s50, %s51
    %p62 = scmp.eq.s32.totalorder %s16, 0
    %p63 = por %p61, %p62
    %p64 = scmp.ne.s32.totalorder %s50, %s51
    %p65 = scmp.eq.s32.totalorder %s17, 1
    %p66 = por %p64, %p65
    %p68 = scmp.ne.s32.totalorder %s51, %s67
    %p69 = scmp.eq.s32.totalorder %s17, 0
    %p70 = por %p68, %p69
    %s72 = sadd.s32 %s71, 1
    %p75 = scmp.eq.s32.totalorder %s11, 1
    %p76 = scmp.ne.s32.totalorder %s71, %s73
    %p77 = scmp.eq.s32.totalorder %s11, 0
    %p78 = por %p76, %p77
    %p79 = scmp.ne.s32.totalorder %s71, %s73
    %p80 = scmp.eq.s32.totalorder %s16, 1
    %p81 = por %p79, %p80
    %p82 = scmp.ne.s32.totalorder %s73, %s74
    %p83 = scmp.eq.s32.totalorder %s16, 0
    %p84 = por %p82, %p83
    %p85 = scmp.ne.s32.totalorder %s73, %s74
    %p86 = scmp.eq.s32.totalorder %s17, 1
    %p87 = por %p85, %p86
    %p89 = scmp.ne.s32.totalorder %s74, %s88
    %p90 = scmp.eq.s32.totalorder %s17, 0
    %p91 = por %p89, %p90
    %s92 = ssub.s32 %s11, %s18
    %p93 = scmp.eq.s32.totalorder %s92, 0
    %s95 = sadd.s32 %s94, 1
    %s96 = scalar_select %p93, %s94, %s95
    %p99 = pneg %p93
    %p100 = scmp.eq.s32.totalorder %s11, 1
    %p101 = por %p99, %p100
    %p102 = scmp.ne.s32.totalorder %s94, %s97
    %p103 = scmp.eq.s32.totalorder %s11, 0
    %p104 = por %p102, %p103
    %p105 = scmp.ne.s32.totalorder %s94, %s97
    %p106 = scmp.eq.s32.totalorder %s16, 1
    %p107 = por %p105, %p106
    %p108 = scmp.ne.s32.totalorder %s97, %s98
    %p109 = scmp.eq.s32.totalorder %s16, 0
    %p110 = por %p108, %p109
    %p111 = scmp.ne.s32.totalorder %s97, %s98
    %p112 = scmp.eq.s32.totalorder %s17, 1
    %p113 = por %p111, %p112
    %p115 = scmp.ne.s32.totalorder %s98, %s114
    %p116 = scmp.eq.s32.totalorder %s17, 0
    %p117 = por %p115, %p116
    %s118 = ssub.s32 %s11, %s18
    %p119 = scmp.eq.s32.totalorder %s118, 0
    %s121 = sadd.s32 %s120, 1
    %s122 = scalar_select %p119, %s120, %s121
    %p125 = pneg %p119
    %p126 = scmp.eq.s32.totalorder %s11, 1
    %p127 = por %p125, %p126
    %p128 = scmp.ne.s32.totalorder %s120, %s123
    %p129 = scmp.eq.s32.totalorder %s11, 0
    %p130 = por %p128, %p129
    %p131 = scmp.ne.s32.totalorder %s120, %s123
    %p132 = scmp.eq.s32.totalorder %s16, 1
    %p133 = por %p131, %p132
    %p134 = scmp.ne.s32.totalorder %s123, %s124
    %p135 = scmp.eq.s32.totalorder %s16, 0
    %p136 = por %p134, %p135
    %p137 = scmp.ne.s32.totalorder %s123, %s124
    %p138 = scmp.eq.s32.totalorder %s17, 1
    %p139 = por %p137, %p138
    %p141 = scmp.ne.s32.totalorder %s124, %s140
    %p142 = scmp.eq.s32.totalorder %s17, 0
    %p143 = por %p141, %p142
    %p144 = scmp.le.s32.totalorder 1, %s11
    %p145 = scmp.lt.s32.totalorder %s11, 3
    %p146 = pnand %p144, %p145
    %p147 = pneg %p146
    // Predicated region
    $region9: #{downsampling_d_forward.2} parent=5 // pred_check
      _
    $region10: #{downsampling_d_forward.2} parent=5 // pred_check_branch
      %149 = sbr.rel (%p146) target = $region12
    $region11: #{downsampling_d_forward.2} parent=5 // pred_region
      %s150 = ssub.s32 %s11, 1
      // Predicated region
      $region13: #{downsampling_d_forward.2} parent=11 // pred_check
        %p151 = pneg %p84
      $region14: #{downsampling_d_forward.2} parent=11 // pred_check_branch
        %153 = sbr.rel (%p151) target = $region16
      $region15: #{downsampling_d_forward.2} parent=11 // pred_region
        _
      $region16: #{downsampling_d_forward.2} parent=11 // pred_fallthru
        _
    $region12: #{downsampling_d_forward.2} parent=5 // pred_fallthru
      _
    %p154 = scmp.lt.s32.totalorder %s11, 2
    // Predicated region
    $region17: #{downsampling_d_forward.2} parent=5 // pred_check
      %p155 = pneg %p154
    $region18: #{downsampling_d_forward.2} parent=5 // pred_check_branch
      %157 = sbr.rel (%p155) target = $region20
    $region19: #{downsampling_d_forward.2} parent=5 // pred_region
      // Predicated region
      $region21: #{downsampling_d_forward.2} parent=19 // pred_check
        %p158 = pneg %p31
      $region22: #{downsampling_d_forward.2} parent=19 // pred_check_branch
        %160 = sbr.rel (%p158) target = $region24
      $region23: #{downsampling_d_forward.2} parent=19 // pred_region
        %p161 = scmp.lt.s32.totalorder %s11, 1
        %s162 = scalar_select %p161, %s11, 1
        %s163 = smul.addr %s162, 2
        %s164 = scalar_lea.vmem %s0, %s163
      $region24: #{downsampling_d_forward.2} parent=19 // pred_fallthru
        _
      // Predicated region
      $region25: #{downsampling_d_forward.2} parent=19 // pred_check
        %p165 = pneg %p57
      $region26: #{downsampling_d_forward.2} parent=19 // pred_check_branch
        %167 = sbr.rel (%p165) target = $region28
      $region27: #{downsampling_d_forward.2} parent=19 // pred_region
        %p168 = scmp.lt.s32.totalorder %s11, 1
        %s169 = scalar_select %p168, %s11, 1
        %s170 = smul.addr %s169, 2
        %s171 = scalar_lea.vmem %s1, %s170
      $region28: #{downsampling_d_forward.2} parent=19 // pred_fallthru
        _
    $region20: #{downsampling_d_forward.2} parent=5 // pred_fallthru
      _
    %p172 = scmp.le.s32.totalorder 1, %s11
    %p173 = scmp.lt.s32.totalorder %s11, 3
    %p174 = pnand %p172, %p173
    %p175 = pneg %p174
    // Predicated region
    $region29: #{downsampling_d_forward.2} parent=5 // pred_check
      _
    $region30: #{downsampling_d_forward.2} parent=5 // pred_check_branch
      %177 = sbr.rel (%p174) target = $region32
    $region31: #{downsampling_d_forward.2} parent=5 // pred_region
      %s178 = ssub.s32 %s11, 1
      %p179 = scmp.lt.s32.totalorder %s16, 1
      %s180 = scalar_select %p179, %s16, 1
      %s181 = smul.addr %s180, 2
      %s182 = scalar_lea.vmem %s0, %s181
      %p183 = pneg %p37
      %p184 = pneg %p34
      %p185 = scmp.lt.s32.totalorder %s16, 1
      %s186 = scalar_select %p185, %s16, 1
      %s187 = smul.addr %s186, 2
      %s188 = scalar_lea.vmem %s1, %s187
      %p189 = pneg %p63
      %p190 = pneg %p60
      %p191 = pneg %p84
      %p192 = pneg %p81
      %p193 = pneg %p110
      %p194 = pneg %p107
      %p195 = scmp.lt.s32.totalorder %s16, 1
      %s196 = scalar_select %p195, %s16, 1
      %s197 = smul.addr %s196, 8
      %s198 = scalar_lea.vmem %s3, %s197
      %p199 = pneg %p136
      %p200 = pneg %p133
      %p201 = scmp.lt.s32.totalorder %s16, 1
      %s202 = scalar_select %p201, %s16, 1
      %s203 = smul.addr %s202, 8
      %s204 = scalar_lea.vmem %s4, %s203
      %p205 = scmp.lt.s32.totalorder %s16, 1
      %s206 = scalar_select %p205, %s16, 1
      %s207 = smul.addr %s206, 2
      %s208 = scalar_lea.vmem %s0, %s207
      %p209 = scmp.lt.s32.totalorder %s16, 1
      %s210 = scalar_select %p209, %s16, 1
      %s211 = smul.addr %s210, 2
      %s212 = scalar_lea.vmem %s1, %s211
      %p213 = scmp.lt.s32.totalorder %s16, 1
      %s214 = scalar_select %p213, %s16, 1
      %s215 = smul.addr %s214, 8
      %s216 = scalar_lea.vmem %s3, %s215
      %p217 = scmp.lt.s32.totalorder %s16, 1
      %s218 = scalar_select %p217, %s16, 1
      %s219 = smul.addr %s218, 8
      %s220 = scalar_lea.vmem %s4, %s219
      %v222 = vld [vmem:[%s208] sm:$0x3]
      %vm223 = vcmask 58368
      %224 = vst.msk [vmem:[#allocation2] sm:$0x3] %vm223, %v222
      %v225 = vld [vmem:[%s212] sm:$0x3]
      %v227 = vcombine.low %v225, %v225
      %v229 = vunpack.c.l.s4 1983009808
      %v230 = vunpack.c.0.s8 %v229
      %v231 = vlaneseq
      %v232 = vshrl.u32 %v231, 7
      %v233 = vsub.s32 %v230, %v232
      %v234 = vrot.slane %v227, %v233
      %vm236 = vcmask 60418
      %237 = vst.msk [vmem:[#allocation2] sm:$0xc] %vm236, %v234
      %v238 = vld [vmem:[%s208] sm:$0x3]
      %v241 = vunpack.c.l.s4 1983009808
      %v242 = vunpack.c.0.s8 %v241
      %v243 = vlaneseq
      %v244 = vshrl.u32 %v243, 7
      %v245 = vsub.s32 %v242, %v244
      %v246 = vrot.slane %v238, %v245
      %247 = vrot.lane.b32.xlu0 %v246, 127
      %v248 = vpop.permute.xlu0 %247
      %250 = vst.msk [vmem:[#allocation2 + $0x4] sm:$0x3] %vm223, %v248
      %v251 = vld [vmem:[%s2] sm:$0xf]
      %v252 = vld [vmem:[#allocation2] sm:$0xf]
      %v253 = vld [vmem:[#allocation2 + $0x4] sm:$0x3]
      %v256 = vunpack.c.l.b16 %v252
      %v257 = vunpack.c.l.b16 %v253
      %v258 = vpack.c.b16 %v257, %v256
      %vm259 = vcmask 97280
      %v261 = vsel %vm259, %v251, 0
      %vm263 = vcmask 1045504
      %v265 = vsel %vm263, %v258, 0
      %267 = vmatprep.subr.bf16.mxu0 0
      %268 = vmatpush1.bf16.msra.mxu0 %v265
      %269 = vmatprep.subr.bf16.mxu0 0
      %270 = vmatpush1.bf16.msra.mxu0 0
      %271 = vmatprep.subr.bf16.mxu0 0
      %272 = vmatpush1.bf16.msra.mxu0 0
      %273 = vmatprep.subr.bf16.mxu0 0
      %274 = vmatpush1.bf16.msra.mxu0 0
      %275 = vmatprep.subr.bf16.mxu0 0
      %276 = vmatpush1.bf16.msra.mxu0 0
      %277 = vmatprep.subr.bf16.mxu0 0
      %278 = vmatpush1.bf16.msra.mxu0 0
      %279 = vmatprep.subr.bf16.mxu0 0
      %280 = vmatpush1.bf16.msra.mxu0 0
      %281 = vmatprep.subr.bf16.mxu0 0
      %282 = vmatpush1.bf16.msra.mxu0 0
      %283 = vmatprep.subr.bf16.mxu0 0
      %284 = vmatpush1.bf16.msra.mxu0 0
      %285 = vmatprep.subr.bf16.mxu0 0
      %286 = vmatpush1.bf16.msra.mxu0 0
      %287 = vmatprep.subr.bf16.mxu0 0
      %288 = vmatpush1.bf16.msra.mxu0 0
      %289 = vmatprep.subr.bf16.mxu0 0
      %290 = vmatpush1.bf16.msra.mxu0 0
      %291 = vmatprep.subr.bf16.mxu0 0
      %292 = vmatpush1.bf16.msra.mxu0 0
      %293 = vmatprep.subr.bf16.mxu0 0
      %294 = vmatpush1.bf16.msra.mxu0 0
      %295 = vmatprep.subr.bf16.mxu0 0
      %296 = vmatpush1.bf16.msra.mxu0 0
      %297 = vmatprep.subr.bf16.mxu0 0
      %298 = vmatpush1.bf16.msra.mxu0 0
      %299 = vmatprep.mubr.bf16.mxu0 0
      %300 = vmatmul.mubr.bf16.gmra.mrb[0].mxu0 %v261
      %v301 = vpop.f32.mrb[0].mxu0
      %v302 = vadd.f32 0.0, %v301
      %v303 = vpop.f32.mrb[0].mxu0
      %v304 = vpop.f32.mrb[0].mxu0
      %v305 = vpop.f32.mrb[0].mxu0
      %306 = vdwg.mxu0
      %vm307 = vcmask 64512
      %v308 = vsel %vm307, %v302, 0.0
      %309 = vadd.xlane.f32.xlu0 %v308
      %v310 = vpop.xlane.xlu0 %309
      %vm311 = vcmask 7168
      %312 = vst.msk [vmem:[%s216] sm:$0xff] %vm311, %v310
      %v313 = vmul.f32 %v302, %v302
      %v314 = vsel %vm307, %v313, 0.0
      %315 = vadd.xlane.f32.xlu0 %v314
      %v316 = vpop.xlane.xlu0 %315
      %317 = vst.msk [vmem:[%s220] sm:$0xff] %vm311, %v316
      %p318 = scmp.lt.s32.totalorder %s16, 1
      %s319 = scalar_select %p318, %s16, 1
      %s320 = smul.addr %s319, 8
      %s321 = scalar_lea.vmem %s3, %s320
      %p322 = scmp.lt.s32.totalorder %s16, 1
      %s323 = scalar_select %p322, %s16, 1
      %s324 = smul.addr %s323, 8
      %s325 = scalar_lea.vmem %s4, %s324
      // Predicated region
      $region33: #{downsampling_d_forward.2} parent=31 // pred_check
        %p326 = pneg %p107
      $region34: #{downsampling_d_forward.2} parent=31 // pred_check_branch
        %328 = sbr.rel (%p326) target = $region36
      $region35: #{downsampling_d_forward.2} parent=31 // pred_region
        _
      $region36: #{downsampling_d_forward.2} parent=31 // pred_fallthru
        _
      // Predicated region
      $region37: #{downsampling_d_forward.2} parent=31 // pred_check
        %p329 = pneg %p133
      $region38: #{downsampling_d_forward.2} parent=31 // pred_check_branch
        %331 = sbr.rel (%p329) target = $region40
      $region39: #{downsampling_d_forward.2} parent=31 // pred_region
        _
      $region40: #{downsampling_d_forward.2} parent=31 // pred_fallthru
        _
    $region32: #{downsampling_d_forward.2} parent=5 // pred_fallthru
      _
    %p332 = scmp.le.s32.totalorder 2, %s11
    // Predicated region
    $region41: #{downsampling_d_forward.2} parent=5 // pred_check
      %p333 = pneg %p332
    $region42: #{downsampling_d_forward.2} parent=5 // pred_check_branch
      %335 = sbr.rel (%p333) target = $region44
    $region43: #{downsampling_d_forward.2} parent=5 // pred_region
      %s336 = ssub.s32 %s11, 2
      // Predicated region
      $region45: #{downsampling_d_forward.2} parent=43 // pred_check
        %p337 = pneg %p113
      $region46: #{downsampling_d_forward.2} parent=43 // pred_check_branch
        %339 = sbr.rel (%p337) target = $region48
      $region47: #{downsampling_d_forward.2} parent=43 // pred_region
        %p340 = scmp.lt.s32.totalorder %s17, 1
        %s341 = scalar_select %p340, %s17, 1
        %s342 = smul.addr %s341, 8
        %s343 = scalar_lea.vmem %s3, %s342
      $region48: #{downsampling_d_forward.2} parent=43 // pred_fallthru
        _
      // Predicated region
      $region49: #{downsampling_d_forward.2} parent=43 // pred_check
        %p344 = pneg %p139
      $region50: #{downsampling_d_forward.2} parent=43 // pred_check_branch
        %346 = sbr.rel (%p344) target = $region52
      $region51: #{downsampling_d_forward.2} parent=43 // pred_region
        %p347 = scmp.lt.s32.totalorder %s17, 1
        %s348 = scalar_select %p347, %s17, 1
        %s349 = smul.addr %s348, 8
        %s350 = scalar_lea.vmem %s4, %s349
      $region52: #{downsampling_d_forward.2} parent=43 // pred_fallthru
        _
    $region44: #{downsampling_d_forward.2} parent=5 // pred_fallthru
      _
  $region6: #{downsampling_d_forward.2} parent=0 // loop_footer
    %s15 = sadd.s32 1, %s11
  $region7: #{downsampling_d_forward.2} parent=0 // loop_footer_branch
    %10 = sbr.rel target = $region3
  $region8: #{downsampling_d_forward.2} parent=0 // loop_exit
    _

// kernel: downsampling_d_forward.3
$region0: #{downsampling_d_forward.3}
  #allocation0 [shape = 'u32[]', space=smem, size = 0x4, offset = 0x4, fixed_abs, tag = 'smem constant byte address 0x4 - core index']
  #allocation1 [shape = 'u32[144,128]{1,0:T(1,128)}', space=vmem, size = 0x12000, scoped, tag = 'internal scratch']
  #allocation2 [shape = 'bf16[12,8]{1,0:T(8,128)(2,1)}', space=vmem, size = 0x1000, scoped, tag = 'scratch operand']
  %s0 = inlined_call_operand.vmem [shape: bf16[2,4,9], index: 0, kind: input, shape index: {}]
  %s1 = inlined_call_operand.vmem [shape: bf16[2,4,9], index: 1, kind: input, shape index: {}]
  %s2 = inlined_call_operand.vmem [shape: bf16[8,12], index: 2, kind: input, shape index: {}]
  %s3 = inlined_call_operand.vmem [shape: f32[8,2], index: 3, kind: input, shape index: {}]
  %s4 = inlined_call_operand.hbm [shape: f32[2,8,8], index: 4, kind: output, shape index: {}]
  %s5 = sld [smem:[#allocation0]]
  $region49: #{downsampling_d_forward.3} parent=0
    _
  %s7 = ssub.s32 1, %s5
  %s8 = scalar_select 0, %s7, %s5
  $region1: #{downsampling_d_forward.3} parent=0
    #allocation3 [shape = 'u8[8192]{0}', space=vmem, size = 0x2000, scoped, tag = 'output window, operand 0']
    #allocation4 [shape = 's32[2]{0}', space=sflag, size = 0x8, scoped, tag = 'scoped memory for downsampling_d_forward.3']
    %9 = vsyncpa [#allocation4], 0
    %s10 = scalar_lea.sflag [#allocation4], 1
    %11 = vsyncpa %s10, 0
    loop: start=0, step=1, limit=4
    $region2: #{downsampling_d_forward.3} parent=1 // loop_pre_header
      _
    $region3: #{downsampling_d_forward.3} parent=1 // loop_header
      %s13 = sphi 0, %s17
      %p14 = scmp.ge.s32.totalorder %s13, 4
      %s23 = sphi 0, %s25
      %s26 = sphi 0, %s23
      %s27 = sphi 0, %s26
      %s43 = sphi 0, %s27
      %s49 = sphi 0, %s51
      %s52 = sphi 0, %s49
      %s53 = sphi 0, %s52
      %s69 = sphi 0, %s53
      %s73 = sphi 0, %s73
      %s75 = sphi 0, %s73
      %s76 = sphi 0, %s75
      %s90 = sphi 0, %s76
      %s94 = sphi 0, %s94
      %s96 = sphi 0, %s94
      %s97 = sphi 0, %s96
      %s111 = sphi 0, %s97
      %s117 = sphi 0, %s119
      %s120 = sphi 0, %s117
      %s121 = sphi 0, %s120
      %s137 = sphi 0, %s121
    $region4: #{downsampling_d_forward.3} parent=1 // loop_header_branch
      %16 = sbr.rel (%p14) target = $region8
    $region5: #{downsampling_d_forward.3} parent=1 // loop_body
      %s18 = ssub.s32 %s13, 1
      %s19 = ssub.s32 %s13, 2
      %s20 = sadd.s32 %s13, 1
      %s21 = ssub.s32 %s13, %s20
      %p22 = scmp.eq.s32.totalorder %s21, 0
      %s24 = sadd.s32 %s23, 1
      %s25 = scalar_select %p22, %s23, %s24
      %p28 = pneg %p22
      %p29 = scmp.eq.s32.totalorder %s13, 1
      %p30 = por %p28, %p29
      %p31 = scmp.ne.s32.totalorder %s23, %s26
      %p32 = scmp.eq.s32.totalorder %s13, 0
      %p33 = por %p31, %p32
      %p34 = scmp.ne.s32.totalorder %s23, %s26
      %p35 = scmp.eq.s32.totalorder %s18, 1
      %p36 = por %p34, %p35
      %p37 = scmp.ne.s32.totalorder %s26, %s27
      %p38 = scmp.eq.s32.totalorder %s18, 0
      %p39 = por %p37, %p38
      %p40 = scmp.ne.s32.totalorder %s26, %s27
      %p41 = scmp.eq.s32.totalorder %s19, 1
      %p42 = por %p40, %p41
      %p44 = scmp.ne.s32.totalorder %s27, %s43
      %p45 = scmp.eq.s32.totalorder %s19, 0
      %p46 = por %p44, %p45
      %s47 = ssub.s32 %s13, %s20
      %p48 = scmp.eq.s32.totalorder %s47, 0
      %s50 = sadd.s32 %s49, 1
      %s51 = scalar_select %p48, %s49, %s50
      %p54 = pneg %p48
      %p55 = scmp.eq.s32.totalorder %s13, 1
      %p56 = por %p54, %p55
      %p57 = scmp.ne.s32.totalorder %s49, %s52
      %p58 = scmp.eq.s32.totalorder %s13, 0
      %p59 = por %p57, %p58
      %p60 = scmp.ne.s32.totalorder %s49, %s52
      %p61 = scmp.eq.s32.totalorder %s18, 1
      %p62 = por %p60, %p61
      %p63 = scmp.ne.s32.totalorder %s52, %s53
      %p64 = scmp.eq.s32.totalorder %s18, 0
      %p65 = por %p63, %p64
      %p66 = scmp.ne.s32.totalorder %s52, %s53
      %p67 = scmp.eq.s32.totalorder %s19, 1
      %p68 = por %p66, %p67
      %p70 = scmp.ne.s32.totalorder %s53, %s69
      %p71 = scmp.eq.s32.totalorder %s19, 0
      %p72 = por %p70, %p71
      %s74 = sadd.s32 %s73, 1
      %p77 = scmp.eq.s32.totalorder %s13, 1
      %p78 = scmp.ne.s32.totalorder %s73, %s75
      %p79 = scmp.eq.s32.totalorder %s13, 0
      %p80 = por %p78, %p79
      %p81 = scmp.ne.s32.totalorder %s73, %s75
      %p82 = scmp.eq.s32.totalorder %s18, 1
      %p83 = por %p81, %p82
      %p84 = scmp.ne.s32.totalorder %s75, %s76
      %p85 = scmp.eq.s32.totalorder %s18, 0
      %p86 = por %p84, %p85
      %p87 = scmp.ne.s32.totalorder %s75, %s76
      %p88 = scmp.eq.s32.totalorder %s19, 1
      %p89 = por %p87, %p88
      %p91 = scmp.ne.s32.totalorder %s76, %s90
      %p92 = scmp.eq.s32.totalorder %s19, 0
      %p93 = por %p91, %p92
      %s95 = sadd.s32 %s94, 1
      %p98 = scmp.eq.s32.totalorder %s13, 1
      %p99 = scmp.ne.s32.totalorder %s94, %s96
      %p100 = scmp.eq.s32.totalorder %s13, 0
      %p101 = por %p99, %p100
      %p102 = scmp.ne.s32.totalorder %s94, %s96
      %p103 = scmp.eq.s32.totalorder %s18, 1
      %p104 = por %p102, %p103
      %p105 = scmp.ne.s32.totalorder %s96, %s97
      %p106 = scmp.eq.s32.totalorder %s18, 0
      %p107 = por %p105, %p106
      %p108 = scmp.ne.s32.totalorder %s96, %s97
      %p109 = scmp.eq.s32.totalorder %s19, 1
      %p110 = por %p108, %p109
      %p112 = scmp.ne.s32.totalorder %s97, %s111
      %p113 = scmp.eq.s32.totalorder %s19, 0
      %p114 = por %p112, %p113
      %s115 = ssub.s32 %s13, %s20
      %p116 = scmp.eq.s32.totalorder %s115, 0
      %s118 = sadd.s32 %s117, 1
      %s119 = scalar_select %p116, %s117, %s118
      %p122 = pneg %p116
      %p123 = scmp.eq.s32.totalorder %s13, 1
      %p124 = por %p122, %p123
      %p125 = scmp.ne.s32.totalorder %s117, %s120
      %p126 = scmp.eq.s32.totalorder %s13, 0
      %p127 = por %p125, %p126
      %p128 = scmp.ne.s32.totalorder %s117, %s120
      %p129 = scmp.eq.s32.totalorder %s18, 1
      %p130 = por %p128, %p129
      %p131 = scmp.ne.s32.totalorder %s120, %s121
      %p132 = scmp.eq.s32.totalorder %s18, 0
      %p133 = por %p131, %p132
      %p134 = scmp.ne.s32.totalorder %s120, %s121
      %p135 = scmp.eq.s32.totalorder %s19, 1
      %p136 = por %p134, %p135
      %p138 = scmp.ne.s32.totalorder %s121, %s137
      %p139 = scmp.eq.s32.totalorder %s19, 0
      %p140 = por %p138, %p139
      %p141 = scmp.le.s32.totalorder 1, %s13
      %p142 = scmp.lt.s32.totalorder %s13, 3
      %p143 = pnand %p141, %p142
      %p144 = pneg %p143
      // Predicated region
      $region9: #{downsampling_d_forward.3} parent=5 // pred_check
        _
      $region10: #{downsampling_d_forward.3} parent=5 // pred_check_branch
        %146 = sbr.rel (%p143) target = $region12
      $region11: #{downsampling_d_forward.3} parent=5 // pred_region
        %s147 = ssub.s32 %s13, 1
        // Predicated region
        $region13: #{downsampling_d_forward.3} parent=11 // pred_check
          %p148 = pneg %p86
        $region14: #{downsampling_d_forward.3} parent=11 // pred_check_branch
          %150 = sbr.rel (%p148) target = $region16
        $region15: #{downsampling_d_forward.3} parent=11 // pred_region
          _
        $region16: #{downsampling_d_forward.3} parent=11 // pred_fallthru
          _
        // Predicated region
        $region17: #{downsampling_d_forward.3} parent=11 // pred_check
          %p151 = pneg %p107
        $region18: #{downsampling_d_forward.3} parent=11 // pred_check_branch
          %153 = sbr.rel (%p151) target = $region20
        $region19: #{downsampling_d_forward.3} parent=11 // pred_region
          _
        $region20: #{downsampling_d_forward.3} parent=11 // pred_fallthru
          _
      $region12: #{downsampling_d_forward.3} parent=5 // pred_fallthru
        _
      %p154 = scmp.lt.s32.totalorder %s13, 2
      // Predicated region
      $region21: #{downsampling_d_forward.3} parent=5 // pred_check
        %p155 = pneg %p154
      $region22: #{downsampling_d_forward.3} parent=5 // pred_check_branch
        %157 = sbr.rel (%p155) target = $region24
      $region23: #{downsampling_d_forward.3} parent=5 // pred_region
        // Predicated region
        $region25: #{downsampling_d_forward.3} parent=23 // pred_check
          %p158 = pneg %p33
        $region26: #{downsampling_d_forward.3} parent=23 // pred_check_branch
          %160 = sbr.rel (%p158) target = $region28
        $region27: #{downsampling_d_forward.3} parent=23 // pred_region
          %p161 = scmp.lt.s32.totalorder %s13, 1
          %s162 = scalar_select %p161, %s13, 1
          %s163 = smul.addr %s162, 2
          %s164 = scalar_lea.vmem %s0, %s163
        $region28: #{downsampling_d_forward.3} parent=23 // pred_fallthru
          _
        // Predicated region
        $region29: #{downsampling_d_forward.3} parent=23 // pred_check
          %p165 = pneg %p59
        $region30: #{downsampling_d_forward.3} parent=23 // pred_check_branch
          %167 = sbr.rel (%p165) target = $region32
        $region31: #{downsampling_d_forward.3} parent=23 // pred_region
          %p168 = scmp.lt.s32.totalorder %s13, 1
          %s169 = scalar_select %p168, %s13, 1
          %s170 = smul.addr %s169, 2
          %s171 = scalar_lea.vmem %s1, %s170
        $region32: #{downsampling_d_forward.3} parent=23 // pred_fallthru
          _
      $region24: #{downsampling_d_forward.3} parent=5 // pred_fallthru
        _
      %p172 = scmp.le.s32.totalorder 1, %s13
      %p173 = scmp.lt.s32.totalorder %s13, 3
      %p174 = pnand %p172, %p173
      %p175 = pneg %p174
      // Predicated region
      $region33: #{downsampling_d_forward.3} parent=5 // pred_check
        _
      $region34: #{downsampling_d_forward.3} parent=5 // pred_check_branch
        %177 = sbr.rel (%p174) target = $region36
      $region35: #{downsampling_d_forward.3} parent=5 // pred_region
        %s178 = ssub.s32 %s13, 1
        %p179 = scmp.lt.s32.totalorder %s18, 1
        %s180 = scalar_select %p179, %s18, 1
        %s181 = smul.addr %s180, 2
        %s182 = scalar_lea.vmem %s0, %s181
        %p183 = pneg %p39
        %p184 = pneg %p36
        %p185 = scmp.lt.s32.totalorder %s18, 1
        %s186 = scalar_select %p185, %s18, 1
        %s187 = smul.addr %s186, 2
        %s188 = scalar_lea.vmem %s1, %s187
        %p189 = pneg %p65
        %p190 = pneg %p62
        %p191 = pneg %p86
        %p192 = pneg %p83
        %p193 = pneg %p107
        %p194 = pneg %p104
        %p195 = pneg %p133
        %p196 = pneg %p130
        %s197 = sand.u32 %s120, 1
        %s198 = scalar_lea.sflag [#allocation4], %s197
        %s199 = sand.u32 %s120, 1
        %s200 = smul.addr %s199, 8
        %s201 = scalar_lea.vmem [#allocation3], %s200
        %p202 = scmp.lt.s32.totalorder %s18, 1
        %s203 = scalar_select %p202, %s18, 1
        %s204 = smul.addr %s203, 2
        %s205 = scalar_lea.vmem %s0, %s204
        %p206 = scmp.lt.s32.totalorder %s18, 1
        %s207 = scalar_select %p206, %s18, 1
        %s208 = smul.addr %s207, 2
        %s209 = scalar_lea.vmem %s1, %s208
        %v211 = vld [vmem:[%s205] sm:$0x3]
        %vm212 = vcmask 58368
        %213 = vst.msk [vmem:[#allocation2] sm:$0x3] %vm212, %v211
        %v214 = vld [vmem:[%s209] sm:$0x3]
        %v216 = vcombine.low %v214, %v214
        %v218 = vunpack.c.l.s4 1983009808
        %v219 = vunpack.c.0.s8 %v218
        %v220 = vlaneseq
        %v221 = vshrl.u32 %v220, 7
        %v222 = vsub.s32 %v219, %v221
        %v223 = vrot.slane %v216, %v222
        %vm225 = vcmask 60418
        %226 = vst.msk [vmem:[#allocation2] sm:$0xc] %vm225, %v223
        %v227 = vld [vmem:[%s205] sm:$0x3]
        %v230 = vunpack.c.l.s4 1983009808
        %v231 = vunpack.c.0.s8 %v230
        %v232 = vlaneseq
        %v233 = vshrl.u32 %v232, 7
        %v234 = vsub.s32 %v231, %v233
        %v235 = vrot.slane %v227, %v234
        %236 = vrot.lane.b32.xlu0 %v235, 127
        %v237 = vpop.permute.xlu0 %236
        %239 = vst.msk [vmem:[#allocation2 + $0x4] sm:$0x3] %vm212, %v237
        %v240 = vld [vmem:[%s2] sm:$0xf]
        %v241 = vld [vmem:[#allocation2] sm:$0xf]
        %v242 = vld [vmem:[#allocation2 + $0x4] sm:$0x3]
        %v245 = vunpack.c.l.b16 %v241
        %v246 = vunpack.c.l.b16 %v242
        %v247 = vpack.c.b16 %v246, %v245
        %vm248 = vcmask 97280
        %v250 = vsel %vm248, %v240, 0
        %vm252 = vcmask 1045504
        %v254 = vsel %vm252, %v247, 0
        %256 = vmatprep.subr.bf16.mxu0 0
        %257 = vmatpush1.bf16.msra.mxu0 %v254
        %258 = vmatprep.subr.bf16.mxu0 0
        %259 = vmatpush1.bf16.msra.mxu0 0
        %260 = vmatprep.subr.bf16.mxu0 0
        %261 = vmatpush1.bf16.msra.mxu0 0
        %262 = vmatprep.subr.bf16.mxu0 0
        %263 = vmatpush1.bf16.msra.mxu0 0
        %264 = vmatprep.subr.bf16.mxu0 0
        %265 = vmatpush1.bf16.msra.mxu0 0
        %266 = vmatprep.subr.bf16.mxu0 0
        %267 = vmatpush1.bf16.msra.mxu0 0
        %268 = vmatprep.subr.bf16.mxu0 0
        %269 = vmatpush1.bf16.msra.mxu0 0
        %270 = vmatprep.subr.bf16.mxu0 0
        %271 = vmatpush1.bf16.msra.mxu0 0
        %272 = vmatprep.subr.bf16.mxu0 0
        %273 = vmatpush1.bf16.msra.mxu0 0
        %274 = vmatprep.subr.bf16.mxu0 0
        %275 = vmatpush1.bf16.msra.mxu0 0
        %276 = vmatprep.subr.bf16.mxu0 0
        %277 = vmatpush1.bf16.msra.mxu0 0
        %278 = vmatprep.subr.bf16.mxu0 0
        %279 = vmatpush1.bf16.msra.mxu0 0
        %280 = vmatprep.subr.bf16.mxu0 0
        %281 = vmatpush1.bf16.msra.mxu0 0
        %282 = vmatprep.subr.bf16.mxu0 0
        %283 = vmatpush1.bf16.msra.mxu0 0
        %284 = vmatprep.subr.bf16.mxu0 0
        %285 = vmatpush1.bf16.msra.mxu0 0
        %286 = vmatprep.subr.bf16.mxu0 0
        %287 = vmatpush1.bf16.msra.mxu0 0
        %288 = vmatprep.mubr.bf16.mxu0 0
        %289 = vmatmul.mubr.bf16.gmra.mrb[0].mxu0 %v250
        %v290 = vpop.f32.mrb[0].mxu0
        %v291 = vadd.f32 0.0, %v290
        %v292 = vpop.f32.mrb[0].mxu0
        %v293 = vpop.f32.mrb[0].mxu0
        %v294 = vpop.f32.mrb[0].mxu0
        %295 = vdwg.mxu0
        %v296 = vld [vmem:[%s3] sm:$0xff]
        %298 = vset.pattern.permute.xlu0 0
        %299 = vperm.xlu0 %298, %v296
        %v300 = vpop.permute.xlu0 %299
        %v302 = vmul.f32 %v291, %v300
        %303 = vset.pattern.permute.xlu0 1
        %304 = vperm.xlu0 %303, %v296
        %v305 = vpop.permute.xlu0 %304
        %v307 = vadd.f32 %v302, %v305
        %vm308 = vcmp.ge.f32.partialorder %v307, 0.0
        %v309 = vmul.f32 %v307, 0.2
        %v310 = vsel %vm308, %v307, %v309
        %vm311 = vcmask 64512
        %312 = vst.msk [vmem:[%s201] sm:$0xff] %vm311, %v310
        %s313 = sand.u32 %s120, 1
        %s314 = scalar_lea.sflag [#allocation4], %s313
        %s315 = sand.u32 %s120, 1
        %s316 = smul.addr %s315, 8
        %s317 = scalar_lea.vmem [#allocation3], %s316
        // Predicated region
        $region37: #{downsampling_d_forward.3} parent=35 // pred_check
          %p318 = pneg %p130
        $region38: #{downsampling_d_forward.3} parent=35 // pred_check_branch
          %320 = sbr.rel (%p318) target = $region40
        $region39: #{downsampling_d_forward.3} parent=35 // pred_region
          %s322 = ssub.s32 128, 128
          %323 = vsyncadd %s314, %s322
          %s324 = smul.addr %s18, 128
          %s325 = scalar_lea.hbm %s4, %s324
          %s327 = sshll.u32 %s317, 4
          %s328 = int_to_ptr.vmem [resolvable:$true] %s327
          %330 = dma.vmem_to_hbm [thread:$0]  %s328, 128, %s325, %s314
        $region40: #{downsampling_d_forward.3} parent=35 // pred_fallthru
          _
      $region36: #{downsampling_d_forward.3} parent=5 // pred_fallthru
        _
      %p331 = scmp.le.s32.totalorder 2, %s13
      // Predicated region
      $region41: #{downsampling_d_forward.3} parent=5 // pred_check
        %p332 = pneg %p331
      $region42: #{downsampling_d_forward.3} parent=5 // pred_check_branch
        %334 = sbr.rel (%p332) target = $region44
      $region43: #{downsampling_d_forward.3} parent=5 // pred_region
        %s335 = ssub.s32 %s13, 2
        // Predicated region
        $region45: #{downsampling_d_forward.3} parent=43 // pred_check
          %p336 = pneg %p136
        $region46: #{downsampling_d_forward.3} parent=43 // pred_check_branch
          %338 = sbr.rel (%p336) target = $region48
        $region47: #{downsampling_d_forward.3} parent=43 // pred_region
          %s339 = sand.u32 %s121, 1
          %s340 = scalar_lea.sflag [#allocation4], %s339
          %s341 = sand.u32 %s121, 1
          %s342 = smul.addr %s341, 8
          %s343 = scalar_lea.vmem [#allocation3], %s342
          %344 = dma.done %s340, 128
        $region48: #{downsampling_d_forward.3} parent=43 // pred_fallthru
          _
      $region44: #{downsampling_d_forward.3} parent=5 // pred_fallthru
        _
    $region6: #{downsampling_d_forward.3} parent=1 // loop_footer
      %s17 = sadd.s32 1, %s13
    $region7: #{downsampling_d_forward.3} parent=1 // loop_footer_branch
      %12 = sbr.rel target = $region3
    $region8: #{downsampling_d_forward.3} parent=1 // loop_exit
      _
    %345 = vsyncpa [#allocation4], 1
    %s346 = scalar_lea.sflag [#allocation4], 1
    %347 = vsyncpa %s346, 1

</llo_original>
